<compile_context>
chip_gen: v5e
topology: v5e:2x2
jax: 0.10.0
libtpu: 0.0.40
codegen_flags: <defaults>
</compile_context>

<pallas_src>
import jax
import jax.numpy as jnp
from jax.experimental import pallas as pl
from jax.experimental.pallas import tpu as pltpu

LANE = 128


# ---------------------------------------------------------------------------
# Math
# ---------------------------------------------------------------------------
def _mish_math(x, *, in_kernel=False):
    """mish(x) = x * tanh(softplus(x)) with a single transcendental per element.

    tanh(log(1 + e)) = e*(e+2) / (e*(e+2) + 2), e = exp(x).
    The exponent is clamped at 20: there e*(e+2) ~ 2.4e17, so (num + 2) == num
    in f32 and the ratio is exactly 1.0 -- the clamp alone reproduces the
    large-x branch (y == x), no extra compare/select needed.
    """
    xf = x.astype(jnp.float32)
    e = jnp.exp(jnp.minimum(xf, 20.0))
    num = e * (e + 2.0)
    den = num + 2.0
    if in_kernel and x.dtype == jnp.bfloat16:
        # EUP approx reciprocal (~2^-12 rel. error) is invisible at bf16
        # precision and frees VALU ops where bf16 on v7x is VALU-limited.
        y = xf * num * pl.reciprocal(den, approx=True)
    else:
        y = xf * num / den
    return y.astype(x.dtype)


def _mish_kernel(x_ref, o_ref):
    o_ref[...] = _mish_math(x_ref[...], in_kernel=True)


def _mish_ref(x):
    """Reference: numerically stable softplus + tanh (matches torch semantics)."""
    xf = x.astype(jnp.float32)
    sp = jnp.maximum(xf, 0.0) + jnp.log1p(jnp.exp(-jnp.abs(xf)))
    return (xf * jnp.tanh(sp)).astype(x.dtype)


# ---------------------------------------------------------------------------
# Shape / block selection
# ---------------------------------------------------------------------------
def _vmem_capacity_bytes():
    try:
        info = pltpu.get_tpu_info()
        for name in ("vmem_capacity_bytes", "vmem_bytes", "vmem_size_bytes"):
            cap = getattr(info, name, None)
            if cap:
                return int(cap)
    except Exception:
        pass
    return 64 << 20  # conservative (v7x-sized) fallback


def _row_align(dtype):
    # 8 sublane rows for 32-bit, 16 for bf16 (2-per-sublane packing), 32 for 8-bit.
    return 8 * max(1, 4 // jnp.dtype(dtype).itemsize)


def _pick_view(shape, n, dtype):
    """Zero-copy 2-D (rows, cols) view of the array; None -> plain jnp fallback."""
    align = _row_align(dtype)
    if n % LANE == 0:
        # Fully lane-aligned: flat slab.  Prefer a wider lane dim (fewer
        # sublane-loop iterations, maximally lane-dense stores).
        for c in (1024, 512, 256, 128):
            if n % c == 0 and n // c >= align:
                return n // c, c
        return None  # fewer than one aligned block: negligible work
    # Unaligned total size: collapse the original shape to (leading, trailing)
    # so the BlockSpec's last dim equals a full array dim; Mosaic masks the
    # ragged lane edge in-kernel -> no padding copy, no tail concatenate.
    best = None
    lead = 1
    for k in range(1, len(shape)):
        lead *= shape[k - 1]
        trail = n // lead
        if lead < align:
            continue
        trail_padded = -(-trail // LANE) * LANE
        if trail_padded * 4 > (256 << 10):   # keep one padded f32 row <= 256 KiB
            continue
        eff = trail / trail_padded           # lane (VPU/VMEM) utilization
        if eff < 0.4:
            continue
        if best is None or eff > best[0] or (eff == best[0] and lead > best[1]):
            best = (eff, lead, trail)
    if best is None:
        return None
    return best[1], best[2]


def _pick_block_rows(dtype, rows, cols, vmem_cap):
    align = _row_align(dtype)
    cols_padded = -(-cols // LANE) * LANE
    # f32-equivalent footprint (the kernel upcasts to f32): VMEM/16 per block
    # -> 8 MiB blocks on 128 MiB-VMEM v5e/v6e, 4 MiB on 64 MiB-VMEM v7x.
    target_f32_bytes = vmem_cap // 16
    br = max(align, (target_f32_bytes // (cols_padded * 4)) // align * align)
    # Only the last grid block may be partial along rows.
    br = min(br, max(align, rows // align * align))
    # Keep >= 8 grid steps when rows permit: even after v7x splits the
    # "parallel" axis across two TensorCores, each core gets >= 4 blocks so
    # input prefetch / compute / output writeback still overlap.
    min_steps = 8
    if rows >= min_steps * align:
        br = min(br, max(align, (rows // min_steps) // align * align))
    return br


# ---------------------------------------------------------------------------
# pallas_call wrapper
# ---------------------------------------------------------------------------
def _mish_2d(x2, block_rows, vmem_cap):
    rows, cols = x2.shape
    grid = pl.cdiv(rows, block_rows)
    cols_padded = -(-cols // LANE) * LANE
    block_f32_bytes = block_rows * cols_padded * 4
    # Double-buffered in + out (actual dtype) plus whole-block f32 temporaries:
    # 10x the f32-equivalent block covers that with margin, the 3/4-of-physical
    # cap keeps v7x (64 MiB) safe, and the explicit raise defeats v5e's 16 MiB
    # default scoped-VMEM limit.
    vmem_limit = int(min(vmem_cap * 3 // 4, max(32 << 20, 10 * block_f32_bytes)))
    return pl.pallas_call(
        _mish_kernel,
        out_shape=jax.ShapeDtypeStruct(x2.shape, x2.dtype),
        grid=(grid,),
        in_specs=[pl.BlockSpec((block_rows, cols), lambda i: (i, 0))],
        out_specs=pl.BlockSpec((block_rows, cols), lambda i: (i, 0)),
        compiler_params=pltpu.CompilerParams(
            # Single "parallel" axis: relied on for the v7x two-TensorCore
            # (megacore) split; the grid has >= 8 steps whenever sizes permit.
            # TODO(synk): if xprof shows only one v7x core active, switch to an
            # explicit CORE_PARALLEL leading grid axis.
            dimension_semantics=("parallel",),
            vmem_limit_bytes=vmem_limit,
        ),
    )(x2)


def mish(x):
    """Elementwise Mish over an arbitrarily shaped array via a Pallas TPU kernel."""
    orig_shape = x.shape
    n = x.size
    if n == 0:
        return x
    view = _pick_view(orig_shape, n, x.dtype)
    if view is None:
        # Tiny (< one aligned block) or pathologically shaped (no trailing
        # split with decent lane utilization): negligible work, plain jnp.
        return _mish_math(x)
    rows, cols = view
    vmem_cap = _vmem_capacity_bytes()
    br = _pick_block_rows(x.dtype, rows, cols, vmem_cap)
    x2 = x.reshape(rows, cols)               # zero-copy row-major view
    return _mish_2d(x2, br, vmem_cap).reshape(orig_shape)


if __name__ == "__main__":
    key = jax.random.PRNGKey(0)
    k1, k2, k3 = jax.random.split(key, 3)

    # 1) NCHW activation, 128-aligned element count (flat lane-dense slab path).
    x = jax.random.normal(k1, (2, 4, 16, 16), dtype=jnp.float32) * 3.0
    y = jax.block_until_ready(mish(x))
    assert y.shape == x.shape and y.dtype == x.dtype
    assert jnp.allclose(y, _mish_ref(x), atol=1e-5, rtol=1e-5)

    # 2) Non-128-aligned element count: handled fully in-kernel via a
    #    (leading, trailing) view with a masked ragged lane edge -- no tail
    #    concatenate, no padding copy.
    x2 = jax.random.normal(k2, (10, 4, 18, 20), dtype=jnp.float32) * 3.0
    y2 = jax.block_until_ready(mish(x2))
    assert y2.shape == x2.shape and y2.dtype == x2.dtype
    assert jnp.allclose(y2, _mish_ref(x2), atol=1e-5, rtol=1e-5)

    # 3) bf16: exercises the approx-reciprocal (EUP) fast path.
    x3 = jax.random.normal(k3, (2, 4, 16, 16), dtype=jnp.bfloat16) * 3.0
    y3 = jax.block_until_ready(mish(x3))
    assert y3.shape == x3.shape and y3.dtype == x3.dtype
    assert jnp.allclose(y3.astype(jnp.float32), _mish_ref(x3).astype(jnp.float32),
                        atol=3e-2, rtol=3e-2)

    print("KERNEL_OK")
</pallas_src>

<mosaic_0001>
module attributes {stable_mosaic.version = 11 : i64} {
  func.func @_mish_kernel(%arg0: i32, %arg1: memref<8x256xf32, #tpu.memory_space<vmem>>, %arg2: memref<8x256xf32, #tpu.memory_space<vmem>>) attributes {dimension_semantics = [#tpu.dimension_semantics<parallel>], iteration_bounds = array<i64: 1>, scalar_prefetch = 0 : i64, scratch_operands = 0 : i64, tpu.core_type = #tpu.core_type<tc>, window_params = [{transform_indices = @transform_0, window_bounds = array<i64: 8, 256>}, {transform_indices = @transform_1, window_bounds = array<i64: 8, 256>}]} {
    %c0 = arith.constant 0 : index
    %c0_0 = arith.constant 0 : index
    %0 = vector.load %arg1[%c0, %c0_0] : memref<8x256xf32, #tpu.memory_space<vmem>>, vector<8x256xf32>
    %cst = arith.constant 2.000000e+01 : f32
    %1 = vector.broadcast %cst : f32 to vector<8x256xf32>
    %2 = arith.minimumf %0, %1 : vector<8x256xf32>
    %3 = math.exp %2 : vector<8x256xf32>
    %cst_1 = arith.constant 2.000000e+00 : f32
    %4 = vector.broadcast %cst_1 : f32 to vector<8x256xf32>
    %5 = arith.addf %3, %4 : vector<8x256xf32>
    %6 = arith.mulf %3, %5 : vector<8x256xf32>
    %cst_2 = arith.constant 2.000000e+00 : f32
    %7 = vector.broadcast %cst_2 : f32 to vector<8x256xf32>
    %8 = arith.addf %6, %7 : vector<8x256xf32>
    %9 = arith.mulf %0, %6 : vector<8x256xf32>
    %10 = arith.divf %9, %8 : vector<8x256xf32>
    %c0_3 = arith.constant 0 : index
    %c0_4 = arith.constant 0 : index
    %11 = vector.load %arg2[%c0_3, %c0_4] : memref<8x256xf32, #tpu.memory_space<vmem>>, vector<8x256xf32>
    tpu.vector_store %arg2[%c0_3, %c0_4], %10 {strides = array<i32>} : memref<8x256xf32, #tpu.memory_space<vmem>>, vector<8x256xf32>,
    return
  }
  func.func @transform_0(%arg0: i32) -> (i32, i32) {
    %c0_i32 = arith.constant 0 : i32
    %c0_i32_0 = arith.constant 0 : i32
    return %arg0, %c0_i32 : i32, i32
  }
  func.func @transform_1(%arg0: i32) -> (i32, i32) {
    %c0_i32 = arith.constant 0 : i32
    %c0_i32_0 = arith.constant 0 : i32
    return %arg0, %c0_i32 : i32, i32
  }
}

</mosaic_0001>

<llo_original>
// kernel: tpu_custom_call.1
$region0: #{tpu_custom_call.1}
  #allocation0 [shape = 'u32[]', space=smem, size = 0x4, offset = 0x4, fixed_abs, tag = 'smem constant byte address 0x4 - core index']
  #allocation1 [shape = 'u32[72,128]{1,0:T(1,128)}', space=vmem, size = 0x9000, scoped, tag = 'internal scratch']
  %s0 = inlined_call_operand.hbm [shape: f32[8,256], index: 0, kind: input, shape index: {}]
  %s1 = inlined_call_operand.hbm [shape: f32[8,256], index: 1, kind: output, shape index: {}]
  %s2 = sld [smem:[#allocation0]]
  $region18: #{tpu_custom_call.1} parent=0
    _
  %s4 = ssub.s32 1, %s2
  %s5 = scalar_select 0, %s4, %s2
  $region1: #{tpu_custom_call.1} parent=0
    #allocation2 [shape = 'u8[8192]{0}', space=vmem, size = 0x2000, scoped, tag = 'input window, operand 0, single buffered']
    #allocation3 [shape = 's32[1]{0}', space=sflag, size = 0x4, scoped, tag = 'scoped memory for tpu_custom_call.1']
    #allocation4 [shape = 's32[1]{0}', space=sflag, size = 0x4, scoped, tag = 'scoped memory for tpu_custom_call.1']
    #allocation5 [shape = 'u8[8192]{0}', space=vmem, size = 0x2000, scoped, tag = 'output window, operand 0, single buffered']
    %6 = vsyncpa [#allocation3], 0
    %7 = vsyncpa [#allocation4], 0
    // Predicated region
    $region2: #{tpu_custom_call.1} parent=1 // pred_check
      _
    $region3: #{tpu_custom_call.1} parent=1 // pred_check_branch
      %9 = sbr.rel (0) target = $region5
    $region4: #{tpu_custom_call.1} parent=1 // pred_region
      %11 = vsyncadd [#allocation3], 0
      %s13 = sshll.u32 %s0, 4
      %s14 = int_to_ptr.hbm [resolvable:$true] %s13
      %s15 = sshll.u32 [#allocation2], 4
      %s16 = int_to_ptr.vmem [resolvable:$true] %s15
      %18 = dma.hbm_to_vmem [thread:$0]  %s14, 256, %s16, [#allocation3]
    $region5: #{tpu_custom_call.1} parent=1 // pred_fallthru
      _
    // Predicated region
    $region6: #{tpu_custom_call.1} parent=1 // pred_check
      _
    $region7: #{tpu_custom_call.1} parent=1 // pred_check_branch
      %20 = sbr.rel (0) target = $region9
    $region8: #{tpu_custom_call.1} parent=1 // pred_region
      %22 = dma.done [#allocation3], 256
    $region9: #{tpu_custom_call.1} parent=1 // pred_fallthru
      _
    %v23 = vld [vmem:[#allocation2] sm:$0xff]
    %v24 = vld [vmem:[#allocation2 + $0x8] sm:$0xff]
    %v25 = vmin.f32 %v23, 20.0
    %v26 = vmin.f32 %v24, 20.0
    %v27 = vmul.f32 %v25, 1.442695
    %v28 = vpow.pop %v27
    %v29 = vmul.f32 %v26, 1.442695
    %v30 = vpow.pop %v29
    %v31 = vadd.f32 %v28, 2.0
    %v32 = vadd.f32 %v30, 2.0
    %v33 = vmul.f32 %v28, %v31
    %v34 = vmul.f32 %v30, %v32
    %v35 = vadd.f32 %v33, 2.0
    %v36 = vadd.f32 %v34, 2.0
    %v37 = vmul.f32 %v23, %v33
    %v38 = vmul.f32 %v24, %v34
    %v39 = vrcp.pop %v35
    %v40 = vmul.f32 %v35, %v39
    %v41 = vsub.f32 1.0, %v40
    %v42 = vmul.f32 %v39, %v41
    %v43 = vadd.f32 %v39, %v42
    %vm44 = vweird.f32 %v35
    %vm45 = vweird.f32 %v39
    %vm46 = vmor %vm44, %vm45
    %v47 = vsel %vm46, %v39, %v43
    %v48 = vand.u32 2147483647, %v35
    %vm49 = vcmp.eq.f32.partialorder %v48, 8.507059e+37
    %v50 = vand.u32 %v35, 2147483648
    %v51 = vor.u32 1.1754944e-38, %v50
    %v52 = vsel %vm49, %v51, %v47
    %v53 = vmul.f32 %v37, %v52
    %v54 = vrcp.pop %v36
    %v55 = vmul.f32 %v36, %v54
    %v56 = vsub.f32 1.0, %v55
    %v57 = vmul.f32 %v54, %v56
    %v58 = vadd.f32 %v54, %v57
    %vm59 = vweird.f32 %v36
    %vm60 = vweird.f32 %v54
    %vm61 = vmor %vm59, %vm60
    %v62 = vsel %vm61, %v54, %v58
    %v63 = vand.u32 2147483647, %v36
    %vm64 = vcmp.eq.f32.partialorder %v63, 8.507059e+37
    %v65 = vand.u32 %v36, 2147483648
    %v66 = vor.u32 1.1754944e-38, %v65
    %v67 = vsel %vm64, %v66, %v62
    %v68 = vmul.f32 %v38, %v67
    %69 = vst [vmem:[#allocation5] sm:$0xff] %v53
    %70 = vst [vmem:[#allocation5 + $0x8] sm:$0xff] %v68
    // Predicated region
    $region10: #{tpu_custom_call.1} parent=1 // pred_check
      _
    $region11: #{tpu_custom_call.1} parent=1 // pred_check_branch
      %72 = sbr.rel (0) target = $region13
    $region12: #{tpu_custom_call.1} parent=1 // pred_region
      %74 = vsyncadd [#allocation4], 0
      %s76 = sshll.u32 [#allocation5], 4
      %s77 = int_to_ptr.vmem [resolvable:$true] %s76
      %s78 = sshll.u32 %s1, 4
      %s79 = int_to_ptr.hbm [resolvable:$true] %s78
      %81 = dma.vmem_to_hbm [thread:$0]  %s77, 256, %s79, [#allocation4]
    $region13: #{tpu_custom_call.1} parent=1 // pred_fallthru
      _
    // Predicated region
    $region14: #{tpu_custom_call.1} parent=1 // pred_check
      _
    $region15: #{tpu_custom_call.1} parent=1 // pred_check_branch
      %83 = sbr.rel (0) target = $region17
    $region16: #{tpu_custom_call.1} parent=1 // pred_region
      %85 = dma.done [#allocation4], 256
    $region17: #{tpu_custom_call.1} parent=1 // pred_fallthru
      _
    %86 = vsyncpa [#allocation3], 1
    %87 = vsyncpa [#allocation4], 1

</llo_original>
